<compile_context>
chip_gen: v5e
topology: v5e:2x2
jax: 0.10.0
libtpu: 0.0.40
codegen_flags: <defaults>
</compile_context>

<pallas_src>
import functools

import jax
import jax.numpy as jnp
from jax import lax
from jax.experimental import pallas as pl
from jax.experimental.pallas import tpu as pltpu


# ---------------------------------------------------------------------------
# Kernel 1: normalize aux rows to the norm of their target main rows.
# Grid step i handles `tile` aux rows; the `tile` target main rows are
# gathered from HBM with row DMAs (target indices scalar-prefetched to SMEM).
# ---------------------------------------------------------------------------
def _normalize_aux_kernel(tgt_idx_ref, aux_ref, main_hbm, out_ref,
                          tgt_buf, sems, *, tile):
    base = pl.program_id(0) * tile

    # Issue all row gathers first; keep `tile` DMAs in flight.
    for t in range(tile):
        row = tgt_idx_ref[base + t]
        pltpu.make_async_copy(main_hbm.at[pl.ds(row, 1), :],
                              tgt_buf.at[pl.ds(t, 1), :],
                              sems.at[t]).start()
    for t in range(tile):
        pltpu.make_async_copy(main_hbm.at[pl.ds(0, 1), :],
                              tgt_buf.at[pl.ds(t, 1), :],
                              sems.at[t]).wait()

    aux = aux_ref[...]                       # (tile, dim) f32
    tgt = tgt_buf[...]                       # (tile, dim) f32
    tgt_sq = jnp.sum(tgt * tgt, axis=1, keepdims=True)
    cur_sq = jnp.sum(aux * aux, axis=1, keepdims=True)
    # scale = ||tgt|| / ||aux||   (sqrt * rsqrt: no full-precision divide)
    scale = jnp.sqrt(tgt_sq) * lax.rsqrt(cur_sq)
    out_ref[...] = aux * scale


def normalize_aux(aux_w, main_w, magnitude_targets, *, tile=8):
    num_aux, dim = aux_w.shape
    n_pad = pl.cdiv(num_aux, tile) * tile
    pad = n_pad - num_aux
    # Pad with ones / target row 0 so padded rows stay finite; sliced off below.
    aux_p = jnp.pad(aux_w, ((0, pad), (0, 0)), constant_values=1.0)
    tgt_p = jnp.pad(magnitude_targets.astype(jnp.int32), (0, pad))

    out = pl.pallas_call(
        functools.partial(_normalize_aux_kernel, tile=tile),
        out_shape=jax.ShapeDtypeStruct((n_pad, dim), jnp.float32),
        grid_spec=pltpu.PrefetchScalarGridSpec(
            num_scalar_prefetch=1,
            grid=(n_pad // tile,),
            in_specs=[
                pl.BlockSpec((tile, dim), lambda i, tgt: (i, 0)),   # aux rows
                pl.BlockSpec(memory_space=pl.ANY),                  # main table (HBM)
            ],
            out_specs=pl.BlockSpec((tile, dim), lambda i, tgt: (i, 0)),
            scratch_shapes=[
                pltpu.VMEM((tile, dim), jnp.float32),               # gathered targets
                pltpu.SemaphoreType.DMA((tile,)),
            ],
        ),
        compiler_params=pltpu.CompilerParams(
            dimension_semantics=("parallel",)),
    )(tgt_p, aux_p, main_w)
    return out[:num_aux]


# ---------------------------------------------------------------------------
# Kernel 2: batched embedding lookup, routing each index to the main or aux
# table directly (no concatenated table in HBM).  `tokens_per_step` row DMAs
# are kept in flight per grid step; output block is lane-dense (T, dim).
# ---------------------------------------------------------------------------
def _gather_kernel(idx_ref, main_hbm, aux_hbm, out_ref, row_buf, sems,
                   *, tokens_per_step, num_main):
    base = pl.program_id(0) * tokens_per_step

    for t in range(tokens_per_step):
        idx = idx_ref[base + t]

        @pl.when(idx < num_main)
        def _():
            pltpu.make_async_copy(main_hbm.at[pl.ds(idx, 1), :],
                                  row_buf.at[pl.ds(t, 1), :],
                                  sems.at[t]).start()

        @pl.when(idx >= num_main)
        def _():
            pltpu.make_async_copy(aux_hbm.at[pl.ds(idx - num_main, 1), :],
                                  row_buf.at[pl.ds(t, 1), :],
                                  sems.at[t]).start()

    for t in range(tokens_per_step):
        # Wait descriptor only needs the matching byte count (one (1, dim) row).
        pltpu.make_async_copy(main_hbm.at[pl.ds(0, 1), :],
                              row_buf.at[pl.ds(t, 1), :],
                              sems.at[t]).wait()

    out_ref[...] = row_buf[...]


def embedding_lookup(main_w, aux_w, flat_idx, *, tokens_per_step=8):
    num_main, dim = main_w.shape
    n = flat_idx.shape[0]
    n_pad = pl.cdiv(n, tokens_per_step) * tokens_per_step
    idx_p = jnp.pad(flat_idx.astype(jnp.int32), (0, n_pad - n))  # pad -> row 0

    out = pl.pallas_call(
        functools.partial(_gather_kernel,
                          tokens_per_step=tokens_per_step,
                          num_main=num_main),
        out_shape=jax.ShapeDtypeStruct((n_pad, dim), jnp.float32),
        grid_spec=pltpu.PrefetchScalarGridSpec(
            num_scalar_prefetch=1,
            grid=(n_pad // tokens_per_step,),
            in_specs=[
                pl.BlockSpec(memory_space=pl.ANY),   # main table stays in HBM
                pl.BlockSpec(memory_space=pl.ANY),   # aux table stays in HBM
            ],
            out_specs=pl.BlockSpec((tokens_per_step, dim),
                                   lambda i, idx: (i, 0)),
            scratch_shapes=[
                pltpu.VMEM((tokens_per_step, dim), jnp.float32),
                pltpu.SemaphoreType.DMA((tokens_per_step,)),
            ],
        ),
        compiler_params=pltpu.CompilerParams(
            dimension_semantics=("parallel",)),      # shards tokens on v7x megacore
    )(idx_p, main_w, aux_w)
    return out[:n]


# ---------------------------------------------------------------------------
# SplitEmbedding forward wrapper
# ---------------------------------------------------------------------------
def split_embedding_forward(x, main_w, aux_w, magnitude_targets=None,
                            *, tokens_per_step=8, aux_tile=8):
    dim = main_w.shape[1]
    if magnitude_targets is not None:
        aux = normalize_aux(aux_w, main_w, magnitude_targets, tile=aux_tile)
    else:
        aux = aux_w
    flat_idx = x.reshape(-1).astype(jnp.int32)
    out_flat = embedding_lookup(main_w, aux, flat_idx,
                                tokens_per_step=tokens_per_step)
    return out_flat.reshape(x.shape + (dim,))


# ---------------------------------------------------------------------------
# Reference (pure JAX) for sanity check
# ---------------------------------------------------------------------------
def _reference(x, main_w, aux_w, magnitude_targets):
    if magnitude_targets is not None:
        tgt = jnp.linalg.norm(main_w[magnitude_targets], axis=1, keepdims=True)
        cur = jnp.linalg.norm(aux_w, axis=1, keepdims=True)
        aux = aux_w * tgt / cur
    else:
        aux = aux_w
    W = jnp.concatenate([main_w, aux], axis=0)
    return W[x]


if __name__ == "__main__":
    # Small, deterministic setup
    num_main, num_aux, dim = 16, 8, 128
    batch, seq = 2, 8

    key = jax.random.PRNGKey(0)
    k_main, k_aux, k_idx = jax.random.split(key, 3)

    # nn.Embedding default init: N(0, 1)
    main_w = jax.random.normal(k_main, (num_main, dim), dtype=jnp.float32)
    aux_w = jax.random.normal(k_aux, (num_aux, dim), dtype=jnp.float32)

    # magnitude_targets: one main index per aux row (deterministic)
    magnitude_targets = (jnp.arange(num_aux, dtype=jnp.int32) * 3) % num_main

    # indices over the full combined vocab
    x = jax.random.randint(k_idx, (batch, seq), 0, num_main + num_aux,
                           dtype=jnp.int32)

    # with magnitude_targets
    out = split_embedding_forward(x, main_w, aux_w, magnitude_targets)
    out = jax.block_until_ready(out)
    ref = _reference(x, main_w, aux_w, magnitude_targets)
    assert out.shape == (batch, seq, dim), out.shape
    assert jnp.allclose(out, ref, atol=1e-5, rtol=1e-5), "mismatch vs reference"

    # without magnitude_targets
    out2 = split_embedding_forward(x, main_w, aux_w, None)
    out2 = jax.block_until_ready(out2)
    ref2 = _reference(x, main_w, aux_w, None)
    assert jnp.allclose(out2, ref2, atol=1e-5, rtol=1e-5), "mismatch (no targets)"

    print("KERNEL_OK")
</pallas_src>

<mosaic_0001>
module attributes {stable_mosaic.version = 11 : i64} {
  func.func @_normalize_aux_kernel(%arg0: i32, %arg1: memref<8xi32, #tpu.memory_space<smem>>, %arg2: memref<8x128xf32, #tpu.memory_space<vmem>>, %arg3: memref<16x128xf32, #tpu.memory_space<any>>, %arg4: memref<8x128xf32, #tpu.memory_space<vmem>>, %arg5: memref<8x128xf32, #tpu.memory_space<vmem>>, %arg6: memref<8x!tpu.dma_semaphore, #tpu.memory_space<semaphore_mem>>) attributes {dimension_semantics = [#tpu.dimension_semantics<parallel>], iteration_bounds = array<i64: 1>, scalar_prefetch = 1 : i64, scratch_operands = 2 : i64, tpu.core_type = #tpu.core_type<tc>, window_params = [{transform_indices = @transform_0, window_bounds = array<i64: 8, 128>}, {}, {transform_indices = @transform_2, window_bounds = array<i64: 8, 128>}]} {
    %c8_i32 = arith.constant 8 : i32
    %0 = arith.muli %arg0, %c8_i32 : i32
    %c0_i32 = arith.constant 0 : i32
    %1 = arith.addi %0, %c0_i32 : i32
    %2 = arith.index_cast %1 : i32 to index
    %3 = memref.load %arg1[%2] : memref<8xi32, #tpu.memory_space<smem>>
    %c0_i32_0 = arith.constant 0 : i32
    %c0_i32_1 = arith.constant 0 : i32
    %4 = tpu.memref_slice %arg3[%3, %c0_i32_1] : memref<16x128xf32, #tpu.memory_space<any>> -> memref<1x128xf32, #tpu.memory_space<any>>
    %c0_i32_2 = arith.constant 0 : i32
    %c0_i32_3 = arith.constant 0 : i32
    %5 = tpu.memref_slice %arg5[%c0_i32_2, %c0_i32_3] : memref<8x128xf32, #tpu.memory_space<vmem>> -> memref<1x128xf32, #tpu.memory_space<vmem>>
    %6 = tpu.memref_slice %arg6[%c0_i32_0] : memref<8x!tpu.dma_semaphore, #tpu.memory_space<semaphore_mem>> -> memref<1x!tpu.dma_semaphore, #tpu.memory_space<semaphore_mem>>
    %7 = tpu.memref_squeeze %6 : memref<1x!tpu.dma_semaphore, #tpu.memory_space<semaphore_mem>> -> memref<!tpu.dma_semaphore, #tpu.memory_space<semaphore_mem>>
    tpu.enqueue_dma source(%4 : memref<1x128xf32, #tpu.memory_space<any>>) target(%5 : memref<1x128xf32, #tpu.memory_space<vmem>>) target_semaphore(%7 : memref<!tpu.dma_semaphore, #tpu.memory_space<semaphore_mem>>)
    %c1_i32 = arith.constant 1 : i32
    %8 = arith.addi %0, %c1_i32 : i32
    %9 = arith.index_cast %8 : i32 to index
    %10 = memref.load %arg1[%9] : memref<8xi32, #tpu.memory_space<smem>>
    %c1_i32_4 = arith.constant 1 : i32
    %c0_i32_5 = arith.constant 0 : i32
    %11 = tpu.memref_slice %arg3[%10, %c0_i32_5] : memref<16x128xf32, #tpu.memory_space<any>> -> memref<1x128xf32, #tpu.memory_space<any>>
    %c1_i32_6 = arith.constant 1 : i32
    %c0_i32_7 = arith.constant 0 : i32
    %12 = tpu.memref_slice %arg5[%c1_i32_6, %c0_i32_7] : memref<8x128xf32, #tpu.memory_space<vmem>> -> memref<1x128xf32, #tpu.memory_space<vmem>>
    %13 = tpu.memref_slice %arg6[%c1_i32_4] : memref<8x!tpu.dma_semaphore, #tpu.memory_space<semaphore_mem>> -> memref<1x!tpu.dma_semaphore, #tpu.memory_space<semaphore_mem>>
    %14 = tpu.memref_squeeze %13 : memref<1x!tpu.dma_semaphore, #tpu.memory_space<semaphore_mem>> -> memref<!tpu.dma_semaphore, #tpu.memory_space<semaphore_mem>>
    tpu.enqueue_dma source(%11 : memref<1x128xf32, #tpu.memory_space<any>>) target(%12 : memref<1x128xf32, #tpu.memory_space<vmem>>) target_semaphore(%14 : memref<!tpu.dma_semaphore, #tpu.memory_space<semaphore_mem>>)
    %c2_i32 = arith.constant 2 : i32
    %15 = arith.addi %0, %c2_i32 : i32
    %16 = arith.index_cast %15 : i32 to index
    %17 = memref.load %arg1[%16] : memref<8xi32, #tpu.memory_space<smem>>
    %c2_i32_8 = arith.constant 2 : i32
    %c0_i32_9 = arith.constant 0 : i32
    %18 = tpu.memref_slice %arg3[%17, %c0_i32_9] : memref<16x128xf32, #tpu.memory_space<any>> -> memref<1x128xf32, #tpu.memory_space<any>>
    %c2_i32_10 = arith.constant 2 : i32
    %c0_i32_11 = arith.constant 0 : i32
    %19 = tpu.memref_slice %arg5[%c2_i32_10, %c0_i32_11] : memref<8x128xf32, #tpu.memory_space<vmem>> -> memref<1x128xf32, #tpu.memory_space<vmem>>
    %20 = tpu.memref_slice %arg6[%c2_i32_8] : memref<8x!tpu.dma_semaphore, #tpu.memory_space<semaphore_mem>> -> memref<1x!tpu.dma_semaphore, #tpu.memory_space<semaphore_mem>>
    %21 = tpu.memref_squeeze %20 : memref<1x!tpu.dma_semaphore, #tpu.memory_space<semaphore_mem>> -> memref<!tpu.dma_semaphore, #tpu.memory_space<semaphore_mem>>
    tpu.enqueue_dma source(%18 : memref<1x128xf32, #tpu.memory_space<any>>) target(%19 : memref<1x128xf32, #tpu.memory_space<vmem>>) target_semaphore(%21 : memref<!tpu.dma_semaphore, #tpu.memory_space<semaphore_mem>>)
    %c3_i32 = arith.constant 3 : i32
    %22 = arith.addi %0, %c3_i32 : i32
    %23 = arith.index_cast %22 : i32 to index
    %24 = memref.load %arg1[%23] : memref<8xi32, #tpu.memory_space<smem>>
    %c3_i32_12 = arith.constant 3 : i32
    %c0_i32_13 = arith.constant 0 : i32
    %25 = tpu.memref_slice %arg3[%24, %c0_i32_13] : memref<16x128xf32, #tpu.memory_space<any>> -> memref<1x128xf32, #tpu.memory_space<any>>
    %c3_i32_14 = arith.constant 3 : i32
    %c0_i32_15 = arith.constant 0 : i32
    %26 = tpu.memref_slice %arg5[%c3_i32_14, %c0_i32_15] : memref<8x128xf32, #tpu.memory_space<vmem>> -> memref<1x128xf32, #tpu.memory_space<vmem>>
    %27 = tpu.memref_slice %arg6[%c3_i32_12] : memref<8x!tpu.dma_semaphore, #tpu.memory_space<semaphore_mem>> -> memref<1x!tpu.dma_semaphore, #tpu.memory_space<semaphore_mem>>
    %28 = tpu.memref_squeeze %27 : memref<1x!tpu.dma_semaphore, #tpu.memory_space<semaphore_mem>> -> memref<!tpu.dma_semaphore, #tpu.memory_space<semaphore_mem>>
    tpu.enqueue_dma source(%25 : memref<1x128xf32, #tpu.memory_space<any>>) target(%26 : memref<1x128xf32, #tpu.memory_space<vmem>>) target_semaphore(%28 : memref<!tpu.dma_semaphore, #tpu.memory_space<semaphore_mem>>)
    %c4_i32 = arith.constant 4 : i32
    %29 = arith.addi %0, %c4_i32 : i32
    %30 = arith.index_cast %29 : i32 to index
    %31 = memref.load %arg1[%30] : memref<8xi32, #tpu.memory_space<smem>>
    %c4_i32_16 = arith.constant 4 : i32
    %c0_i32_17 = arith.constant 0 : i32
    %32 = tpu.memref_slice %arg3[%31, %c0_i32_17] : memref<16x128xf32, #tpu.memory_space<any>> -> memref<1x128xf32, #tpu.memory_space<any>>
    %c4_i32_18 = arith.constant 4 : i32
    %c0_i32_19 = arith.constant 0 : i32
    %33 = tpu.memref_slice %arg5[%c4_i32_18, %c0_i32_19] : memref<8x128xf32, #tpu.memory_space<vmem>> -> memref<1x128xf32, #tpu.memory_space<vmem>>
    %34 = tpu.memref_slice %arg6[%c4_i32_16] : memref<8x!tpu.dma_semaphore, #tpu.memory_space<semaphore_mem>> -> memref<1x!tpu.dma_semaphore, #tpu.memory_space<semaphore_mem>>
    %35 = tpu.memref_squeeze %34 : memref<1x!tpu.dma_semaphore, #tpu.memory_space<semaphore_mem>> -> memref<!tpu.dma_semaphore, #tpu.memory_space<semaphore_mem>>
    tpu.enqueue_dma source(%32 : memref<1x128xf32, #tpu.memory_space<any>>) target(%33 : memref<1x128xf32, #tpu.memory_space<vmem>>) target_semaphore(%35 : memref<!tpu.dma_semaphore, #tpu.memory_space<semaphore_mem>>)
    %c5_i32 = arith.constant 5 : i32
    %36 = arith.addi %0, %c5_i32 : i32
    %37 = arith.index_cast %36 : i32 to index
    %38 = memref.load %arg1[%37] : memref<8xi32, #tpu.memory_space<smem>>
    %c5_i32_20 = arith.constant 5 : i32
    %c0_i32_21 = arith.constant 0 : i32
    %39 = tpu.memref_slice %arg3[%38, %c0_i32_21] : memref<16x128xf32, #tpu.memory_space<any>> -> memref<1x128xf32, #tpu.memory_space<any>>
    %c5_i32_22 = arith.constant 5 : i32
    %c0_i32_23 = arith.constant 0 : i32
    %40 = tpu.memref_slice %arg5[%c5_i32_22, %c0_i32_23] : memref<8x128xf32, #tpu.memory_space<vmem>> -> memref<1x128xf32, #tpu.memory_space<vmem>>
    %41 = tpu.memref_slice %arg6[%c5_i32_20] : memref<8x!tpu.dma_semaphore, #tpu.memory_space<semaphore_mem>> -> memref<1x!tpu.dma_semaphore, #tpu.memory_space<semaphore_mem>>
    %42 = tpu.memref_squeeze %41 : memref<1x!tpu.dma_semaphore, #tpu.memory_space<semaphore_mem>> -> memref<!tpu.dma_semaphore, #tpu.memory_space<semaphore_mem>>
    tpu.enqueue_dma source(%39 : memref<1x128xf32, #tpu.memory_space<any>>) target(%40 : memref<1x128xf32, #tpu.memory_space<vmem>>) target_semaphore(%42 : memref<!tpu.dma_semaphore, #tpu.memory_space<semaphore_mem>>)
    %c6_i32 = arith.constant 6 : i32
    %43 = arith.addi %0, %c6_i32 : i32
    %44 = arith.index_cast %43 : i32 to index
    %45 = memref.load %arg1[%44] : memref<8xi32, #tpu.memory_space<smem>>
    %c6_i32_24 = arith.constant 6 : i32
    %c0_i32_25 = arith.constant 0 : i32
    %46 = tpu.memref_slice %arg3[%45, %c0_i32_25] : memref<16x128xf32, #tpu.memory_space<any>> -> memref<1x128xf32, #tpu.memory_space<any>>
    %c6_i32_26 = arith.constant 6 : i32
    %c0_i32_27 = arith.constant 0 : i32
    %47 = tpu.memref_slice %arg5[%c6_i32_26, %c0_i32_27] : memref<8x128xf32, #tpu.memory_space<vmem>> -> memref<1x128xf32, #tpu.memory_space<vmem>>
    %48 = tpu.memref_slice %arg6[%c6_i32_24] : memref<8x!tpu.dma_semaphore, #tpu.memory_space<semaphore_mem>> -> memref<1x!tpu.dma_semaphore, #tpu.memory_space<semaphore_mem>>
    %49 = tpu.memref_squeeze %48 : memref<1x!tpu.dma_semaphore, #tpu.memory_space<semaphore_mem>> -> memref<!tpu.dma_semaphore, #tpu.memory_space<semaphore_mem>>
    tpu.enqueue_dma source(%46 : memref<1x128xf32, #tpu.memory_space<any>>) target(%47 : memref<1x128xf32, #tpu.memory_space<vmem>>) target_semaphore(%49 : memref<!tpu.dma_semaphore, #tpu.memory_space<semaphore_mem>>)
    %c7_i32 = arith.constant 7 : i32
    %50 = arith.addi %0, %c7_i32 : i32
    %51 = arith.index_cast %50 : i32 to index
    %52 = memref.load %arg1[%51] : memref<8xi32, #tpu.memory_space<smem>>
    %c7_i32_28 = arith.constant 7 : i32
    %c0_i32_29 = arith.constant 0 : i32
    %53 = tpu.memref_slice %arg3[%52, %c0_i32_29] : memref<16x128xf32, #tpu.memory_space<any>> -> memref<1x128xf32, #tpu.memory_space<any>>
    %c7_i32_30 = arith.constant 7 : i32
    %c0_i32_31 = arith.constant 0 : i32
    %54 = tpu.memref_slice %arg5[%c7_i32_30, %c0_i32_31] : memref<8x128xf32, #tpu.memory_space<vmem>> -> memref<1x128xf32, #tpu.memory_space<vmem>>
    %55 = tpu.memref_slice %arg6[%c7_i32_28] : memref<8x!tpu.dma_semaphore, #tpu.memory_space<semaphore_mem>> -> memref<1x!tpu.dma_semaphore, #tpu.memory_space<semaphore_mem>>
    %56 = tpu.memref_squeeze %55 : memref<1x!tpu.dma_semaphore, #tpu.memory_space<semaphore_mem>> -> memref<!tpu.dma_semaphore, #tpu.memory_space<semaphore_mem>>
    tpu.enqueue_dma source(%53 : memref<1x128xf32, #tpu.memory_space<any>>) target(%54 : memref<1x128xf32, #tpu.memory_space<vmem>>) target_semaphore(%56 : memref<!tpu.dma_semaphore, #tpu.memory_space<semaphore_mem>>)
    %c0_i32_32 = arith.constant 0 : i32
    %c0_i32_33 = arith.constant 0 : i32
    %c0_i32_34 = arith.constant 0 : i32
    %57 = tpu.memref_slice %arg3[%c0_i32_33, %c0_i32_34] : memref<16x128xf32, #tpu.memory_space<any>> -> memref<1x128xf32, #tpu.memory_space<any>>
    %c0_i32_35 = arith.constant 0 : i32
    %c0_i32_36 = arith.constant 0 : i32
    %58 = tpu.memref_slice %arg5[%c0_i32_35, %c0_i32_36] : memref<8x128xf32, #tpu.memory_space<vmem>> -> memref<1x128xf32, #tpu.memory_space<vmem>>
    %59 = tpu.memref_slice %arg6[%c0_i32_32] : memref<8x!tpu.dma_semaphore, #tpu.memory_space<semaphore_mem>> -> memref<1x!tpu.dma_semaphore, #tpu.memory_space<semaphore_mem>>
    %60 = tpu.memref_squeeze %59 : memref<1x!tpu.dma_semaphore, #tpu.memory_space<semaphore_mem>> -> memref<!tpu.dma_semaphore, #tpu.memory_space<semaphore_mem>>
    tpu.wait_dma2 semaphore(%60 : memref<!tpu.dma_semaphore, #tpu.memory_space<semaphore_mem>>) src(%57 : memref<1x128xf32, #tpu.memory_space<any>>) dst(%58 : memref<1x128xf32, #tpu.memory_space<vmem>>)
    %c1_i32_37 = arith.constant 1 : i32
    %c0_i32_38 = arith.constant 0 : i32
    %c0_i32_39 = arith.constant 0 : i32
    %61 = tpu.memref_slice %arg3[%c0_i32_38, %c0_i32_39] : memref<16x128xf32, #tpu.memory_space<any>> -> memref<1x128xf32, #tpu.memory_space<any>>
    %c1_i32_40 = arith.constant 1 : i32
    %c0_i32_41 = arith.constant 0 : i32
    %62 = tpu.memref_slice %arg5[%c1_i32_40, %c0_i32_41] : memref<8x128xf32, #tpu.memory_space<vmem>> -> memref<1x128xf32, #tpu.memory_space<vmem>>
    %63 = tpu.memref_slice %arg6[%c1_i32_37] : memref<8x!tpu.dma_semaphore, #tpu.memory_space<semaphore_mem>> -> memref<1x!tpu.dma_semaphore, #tpu.memory_space<semaphore_mem>>
    %64 = tpu.memref_squeeze %63 : memref<1x!tpu.dma_semaphore, #tpu.memory_space<semaphore_mem>> -> memref<!tpu.dma_semaphore, #tpu.memory_space<semaphore_mem>>
    tpu.wait_dma2 semaphore(%64 : memref<!tpu.dma_semaphore, #tpu.memory_space<semaphore_mem>>) src(%61 : memref<1x128xf32, #tpu.memory_space<any>>) dst(%62 : memref<1x128xf32, #tpu.memory_space<vmem>>)
    %c2_i32_42 = arith.constant 2 : i32
    %c0_i32_43 = arith.constant 0 : i32
    %c0_i32_44 = arith.constant 0 : i32
    %65 = tpu.memref_slice %arg3[%c0_i32_43, %c0_i32_44] : memref<16x128xf32, #tpu.memory_space<any>> -> memref<1x128xf32, #tpu.memory_space<any>>
    %c2_i32_45 = arith.constant 2 : i32
    %c0_i32_46 = arith.constant 0 : i32
    %66 = tpu.memref_slice %arg5[%c2_i32_45, %c0_i32_46] : memref<8x128xf32, #tpu.memory_space<vmem>> -> memref<1x128xf32, #tpu.memory_space<vmem>>
    %67 = tpu.memref_slice %arg6[%c2_i32_42] : memref<8x!tpu.dma_semaphore, #tpu.memory_space<semaphore_mem>> -> memref<1x!tpu.dma_semaphore, #tpu.memory_space<semaphore_mem>>
    %68 = tpu.memref_squeeze %67 : memref<1x!tpu.dma_semaphore, #tpu.memory_space<semaphore_mem>> -> memref<!tpu.dma_semaphore, #tpu.memory_space<semaphore_mem>>
    tpu.wait_dma2 semaphore(%68 : memref<!tpu.dma_semaphore, #tpu.memory_space<semaphore_mem>>) src(%65 : memref<1x128xf32, #tpu.memory_space<any>>) dst(%66 : memref<1x128xf32, #tpu.memory_space<vmem>>)
    %c3_i32_47 = arith.constant 3 : i32
    %c0_i32_48 = arith.constant 0 : i32
    %c0_i32_49 = arith.constant 0 : i32
    %69 = tpu.memref_slice %arg3[%c0_i32_48, %c0_i32_49] : memref<16x128xf32, #tpu.memory_space<any>> -> memref<1x128xf32, #tpu.memory_space<any>>
    %c3_i32_50 = arith.constant 3 : i32
    %c0_i32_51 = arith.constant 0 : i32
    %70 = tpu.memref_slice %arg5[%c3_i32_50, %c0_i32_51] : memref<8x128xf32, #tpu.memory_space<vmem>> -> memref<1x128xf32, #tpu.memory_space<vmem>>
    %71 = tpu.memref_slice %arg6[%c3_i32_47] : memref<8x!tpu.dma_semaphore, #tpu.memory_space<semaphore_mem>> -> memref<1x!tpu.dma_semaphore, #tpu.memory_space<semaphore_mem>>
    %72 = tpu.memref_squeeze %71 : memref<1x!tpu.dma_semaphore, #tpu.memory_space<semaphore_mem>> -> memref<!tpu.dma_semaphore, #tpu.memory_space<semaphore_mem>>
    tpu.wait_dma2 semaphore(%72 : memref<!tpu.dma_semaphore, #tpu.memory_space<semaphore_mem>>) src(%69 : memref<1x128xf32, #tpu.memory_space<any>>) dst(%70 : memref<1x128xf32, #tpu.memory_space<vmem>>)
    %c4_i32_52 = arith.constant 4 : i32
    %c0_i32_53 = arith.constant 0 : i32
    %c0_i32_54 = arith.constant 0 : i32
    %73 = tpu.memref_slice %arg3[%c0_i32_53, %c0_i32_54] : memref<16x128xf32, #tpu.memory_space<any>> -> memref<1x128xf32, #tpu.memory_space<any>>
    %c4_i32_55 = arith.constant 4 : i32
    %c0_i32_56 = arith.constant 0 : i32
    %74 = tpu.memref_slice %arg5[%c4_i32_55, %c0_i32_56] : memref<8x128xf32, #tpu.memory_space<vmem>> -> memref<1x128xf32, #tpu.memory_space<vmem>>
    %75 = tpu.memref_slice %arg6[%c4_i32_52] : memref<8x!tpu.dma_semaphore, #tpu.memory_space<semaphore_mem>> -> memref<1x!tpu.dma_semaphore, #tpu.memory_space<semaphore_mem>>
    %76 = tpu.memref_squeeze %75 : memref<1x!tpu.dma_semaphore, #tpu.memory_space<semaphore_mem>> -> memref<!tpu.dma_semaphore, #tpu.memory_space<semaphore_mem>>
    tpu.wait_dma2 semaphore(%76 : memref<!tpu.dma_semaphore, #tpu.memory_space<semaphore_mem>>) src(%73 : memref<1x128xf32, #tpu.memory_space<any>>) dst(%74 : memref<1x128xf32, #tpu.memory_space<vmem>>)
    %c5_i32_57 = arith.constant 5 : i32
    %c0_i32_58 = arith.constant 0 : i32
    %c0_i32_59 = arith.constant 0 : i32
    %77 = tpu.memref_slice %arg3[%c0_i32_58, %c0_i32_59] : memref<16x128xf32, #tpu.memory_space<any>> -> memref<1x128xf32, #tpu.memory_space<any>>
    %c5_i32_60 = arith.constant 5 : i32
    %c0_i32_61 = arith.constant 0 : i32
    %78 = tpu.memref_slice %arg5[%c5_i32_60, %c0_i32_61] : memref<8x128xf32, #tpu.memory_space<vmem>> -> memref<1x128xf32, #tpu.memory_space<vmem>>
    %79 = tpu.memref_slice %arg6[%c5_i32_57] : memref<8x!tpu.dma_semaphore, #tpu.memory_space<semaphore_mem>> -> memref<1x!tpu.dma_semaphore, #tpu.memory_space<semaphore_mem>>
    %80 = tpu.memref_squeeze %79 : memref<1x!tpu.dma_semaphore, #tpu.memory_space<semaphore_mem>> -> memref<!tpu.dma_semaphore, #tpu.memory_space<semaphore_mem>>
    tpu.wait_dma2 semaphore(%80 : memref<!tpu.dma_semaphore, #tpu.memory_space<semaphore_mem>>) src(%77 : memref<1x128xf32, #tpu.memory_space<any>>) dst(%78 : memref<1x128xf32, #tpu.memory_space<vmem>>)
    %c6_i32_62 = arith.constant 6 : i32
    %c0_i32_63 = arith.constant 0 : i32
    %c0_i32_64 = arith.constant 0 : i32
    %81 = tpu.memref_slice %arg3[%c0_i32_63, %c0_i32_64] : memref<16x128xf32, #tpu.memory_space<any>> -> memref<1x128xf32, #tpu.memory_space<any>>
    %c6_i32_65 = arith.constant 6 : i32
    %c0_i32_66 = arith.constant 0 : i32
    %82 = tpu.memref_slice %arg5[%c6_i32_65, %c0_i32_66] : memref<8x128xf32, #tpu.memory_space<vmem>> -> memref<1x128xf32, #tpu.memory_space<vmem>>
    %83 = tpu.memref_slice %arg6[%c6_i32_62] : memref<8x!tpu.dma_semaphore, #tpu.memory_space<semaphore_mem>> -> memref<1x!tpu.dma_semaphore, #tpu.memory_space<semaphore_mem>>
    %84 = tpu.memref_squeeze %83 : memref<1x!tpu.dma_semaphore, #tpu.memory_space<semaphore_mem>> -> memref<!tpu.dma_semaphore, #tpu.memory_space<semaphore_mem>>
    tpu.wait_dma2 semaphore(%84 : memref<!tpu.dma_semaphore, #tpu.memory_space<semaphore_mem>>) src(%81 : memref<1x128xf32, #tpu.memory_space<any>>) dst(%82 : memref<1x128xf32, #tpu.memory_space<vmem>>)
    %c7_i32_67 = arith.constant 7 : i32
    %c0_i32_68 = arith.constant 0 : i32
    %c0_i32_69 = arith.constant 0 : i32
    %85 = tpu.memref_slice %arg3[%c0_i32_68, %c0_i32_69] : memref<16x128xf32, #tpu.memory_space<any>> -> memref<1x128xf32, #tpu.memory_space<any>>
    %c7_i32_70 = arith.constant 7 : i32
    %c0_i32_71 = arith.constant 0 : i32
    %86 = tpu.memref_slice %arg5[%c7_i32_70, %c0_i32_71] : memref<8x128xf32, #tpu.memory_space<vmem>> -> memref<1x128xf32, #tpu.memory_space<vmem>>
    %87 = tpu.memref_slice %arg6[%c7_i32_67] : memref<8x!tpu.dma_semaphore, #tpu.memory_space<semaphore_mem>> -> memref<1x!tpu.dma_semaphore, #tpu.memory_space<semaphore_mem>>
    %88 = tpu.memref_squeeze %87 : memref<1x!tpu.dma_semaphore, #tpu.memory_space<semaphore_mem>> -> memref<!tpu.dma_semaphore, #tpu.memory_space<semaphore_mem>>
    tpu.wait_dma2 semaphore(%88 : memref<!tpu.dma_semaphore, #tpu.memory_space<semaphore_mem>>) src(%85 : memref<1x128xf32, #tpu.memory_space<any>>) dst(%86 : memref<1x128xf32, #tpu.memory_space<vmem>>)
    %c0 = arith.constant 0 : index
    %c0_72 = arith.constant 0 : index
    %89 = vector.load %arg2[%c0, %c0_72] : memref<8x128xf32, #tpu.memory_space<vmem>>, vector<8x128xf32>
    %c0_73 = arith.constant 0 : index
    %c0_74 = arith.constant 0 : index
    %90 = vector.load %arg5[%c0_73, %c0_74] : memref<8x128xf32, #tpu.memory_space<vmem>>, vector<8x128xf32>
    %91 = arith.mulf %90, %90 : vector<8x128xf32>
    %cst = arith.constant dense<0.000000e+00> : vector<8xf32>
    %92 = vector.multi_reduction <add>, %91, %cst [1] : vector<8x128xf32> to vector<8xf32>
    %93 = vector.shape_cast %92 : vector<8xf32> to vector<8x1xf32>
    %94 = arith.mulf %89, %89 : vector<8x128xf32>
    %cst_75 = arith.constant dense<0.000000e+00> : vector<8xf32>
    %95 = vector.multi_reduction <add>, %94, %cst_75 [1] : vector<8x128xf32> to vector<8xf32>
    %96 = vector.shape_cast %95 : vector<8xf32> to vector<8x1xf32>
    %97 = math.sqrt %93 : vector<8x1xf32>
    %98 = math.rsqrt %96 : vector<8x1xf32>
    %99 = arith.mulf %97, %98 : vector<8x1xf32>
    %100 = vector.broadcast %99 : vector<8x1xf32> to vector<8x128xf32>
    %101 = arith.mulf %89, %100 : vector<8x128xf32>
    %c0_76 = arith.constant 0 : index
    %c0_77 = arith.constant 0 : index
    %102 = vector.load %arg4[%c0_76, %c0_77] : memref<8x128xf32, #tpu.memory_space<vmem>>, vector<8x128xf32>
    tpu.vector_store %arg4[%c0_76, %c0_77], %101 {strides = array<i32>} : memref<8x128xf32, #tpu.memory_space<vmem>>, vector<8x128xf32>,
    return
  }
  func.func @transform_0(%arg0: i32, %arg1: memref<8xi32, #tpu.memory_space<smem>>) -> (i32, i32) {
    %c0_i32 = arith.constant 0 : i32
    %c0_i32_0 = arith.constant 0 : i32
    return %arg0, %c0_i32 : i32, i32
  }
  func.func @transform_2(%arg0: i32, %arg1: memref<8xi32, #tpu.memory_space<smem>>) -> (i32, i32) {
    %c0_i32 = arith.constant 0 : i32
    %c0_i32_0 = arith.constant 0 : i32
    return %arg0, %c0_i32 : i32, i32
  }
}

</mosaic_0001>

<llo_original>
// kernel: tpu_custom_call.1
$region0: #{tpu_custom_call.1}
  #allocation0 [shape = 'u32[]', space=smem, size = 0x4, offset = 0x4, fixed_abs, tag = 'smem constant byte address 0x4 - core index']
  #allocation1 [shape = 'u32[72,128]{1,0:T(1,128)}', space=vmem, size = 0x9000, scoped, tag = 'internal scratch']
  #allocation2 [shape = 'f32[8,128]{1,0:T(8,128)}', space=vmem, size = 0x1000, scoped, tag = 'scratch operand']
  #allocation3 [shape = 's32[8]{0}', space=sflag, size = 0x20, scoped, tag = 'scratch operand']
  #allocation4 [shape = 's32[1]{0}', space=sflag, size = 0x4, scoped, tag = 'scoped memory for tpu_custom_call.1']
  #allocation5 [shape = 'u8[512]{0}', space=smem, size = 0x200, scoped, tag = 'prefetched SMEM operand 0']
  #allocation10 [shape = 's32[]', space=sflag, size = 0x4, offset = 0, fixed_abs, tag = 'sflag constant byte address 0x0 - dummy sync flag']
  #allocation11 [shape = 's32[]', space=sflag, size = 0x4, offset = 0, fixed_abs, tag = 'sflag constant byte address 0x0 - dummy sync flag']
  #allocation12 [shape = 'u32[]', space=smem, size = 0x4, offset = 0x44, fixed_abs, tag = 'smem constant byte address 0x44 - assertion arg 0']
  #allocation13 [shape = 'u32[]', space=smem, size = 0x4, offset = 0x48, fixed_abs, tag = 'smem constant byte address 0x48 - assertion arg 1']
  #allocation14 [shape = 's32[]', space=sflag, size = 0x4, offset = 0, fixed_abs, tag = 'sflag constant byte address 0x0 - dummy sync flag']
  #allocation15 [shape = 's32[]', space=sflag, size = 0x4, offset = 0, fixed_abs, tag = 'sflag constant byte address 0x0 - dummy sync flag']
  #allocation16 [shape = 's32[]', space=sflag, size = 0x4, offset = 0, fixed_abs, tag = 'sflag constant byte address 0x0 - dummy sync flag']
  #allocation17 [shape = 's32[]', space=sflag, size = 0x4, offset = 0, fixed_abs, tag = 'sflag constant byte address 0x0 - dummy sync flag']
  #allocation18 [shape = 's32[]', space=sflag, size = 0x4, offset = 0, fixed_abs, tag = 'sflag constant byte address 0x0 - dummy sync flag']
  #allocation19 [shape = 's32[]', space=sflag, size = 0x4, offset = 0, fixed_abs, tag = 'sflag constant byte address 0x0 - dummy sync flag']
  #allocation20 [shape = 's32[]', space=sflag, size = 0x4, offset = 0, fixed_abs, tag = 'sflag constant byte address 0x0 - dummy sync flag']
  #allocation21 [shape = 's32[]', space=sflag, size = 0x4, offset = 0, fixed_abs, tag = 'sflag constant byte address 0x0 - dummy sync flag']
  #allocation22 [shape = 's32[]', space=sflag, size = 0x4, offset = 0, fixed_abs, tag = 'sflag constant byte address 0x0 - dummy sync flag']
  #allocation23 [shape = 's32[]', space=sflag, size = 0x4, offset = 0, fixed_abs, tag = 'sflag constant byte address 0x0 - dummy sync flag']
  #allocation24 [shape = 's32[]', space=sflag, size = 0x4, offset = 0, fixed_abs, tag = 'sflag constant byte address 0x0 - dummy sync flag']
  #allocation25 [shape = 's32[]', space=sflag, size = 0x4, offset = 0, fixed_abs, tag = 'sflag constant byte address 0x0 - dummy sync flag']
  #allocation26 [shape = 's32[]', space=sflag, size = 0x4, offset = 0, fixed_abs, tag = 'sflag constant byte address 0x0 - dummy sync flag']
  #allocation27 [shape = 's32[]', space=sflag, size = 0x4, offset = 0, fixed_abs, tag = 'sflag constant byte address 0x0 - dummy sync flag']
  %s0 = inlined_call_operand.hbm [shape: s32[8], index: 0, kind: input, shape index: {}]
  %s1 = inlined_call_operand.hbm [shape: f32[8,128], index: 1, kind: input, shape index: {}]
  %s2 = inlined_call_operand.hbm [shape: f32[16,128], index: 2, kind: input, shape index: {}]
  %s3 = inlined_call_operand.hbm [shape: f32[8,128], index: 3, kind: output, shape index: {}]
  %s4 = sld [smem:[#allocation0]]
  $region50: #{tpu_custom_call.1} parent=0
    _
  %s6 = ssub.s32 1, %s4
  %s7 = scalar_select 0, %s6, %s4
  %s9 = sshll.u32 %s0, 4
  %s10 = int_to_ptr.hbm [resolvable:$true] %s9
  %12 = dma.hbm_to_smem %s10, 16, [#allocation5], [#allocation4]
  %14 = dma.done [#allocation4], 16
  %15 = sfence
  $region1: #{tpu_custom_call.1} parent=0
    #allocation6 [shape = 'u8[4096]{0}', space=vmem, size = 0x1000, scoped, tag = 'input window, operand 1, single buffered']
    #allocation7 [shape = 's32[1]{0}', space=sflag, size = 0x4, scoped, tag = 'scoped memory for tpu_custom_call.1']
    #allocation8 [shape = 's32[1]{0}', space=sflag, size = 0x4, scoped, tag = 'scoped memory for tpu_custom_call.1']
    #allocation9 [shape = 'u8[4096]{0}', space=vmem, size = 0x1000, scoped, tag = 'output window, operand 0, single buffered']
    %16 = vsyncpa [#allocation7], 0
    %17 = vsyncpa [#allocation8], 0
    // Predicated region
    $region2: #{tpu_custom_call.1} parent=1 // pred_check
      _
    $region3: #{tpu_custom_call.1} parent=1 // pred_check_branch
      %19 = sbr.rel (0) target = $region5
    $region4: #{tpu_custom_call.1} parent=1 // pred_region
      %21 = vsyncadd [#allocation7], 0
      %s23 = sshll.u32 %s1, 4
      %s24 = int_to_ptr.hbm [resolvable:$true] %s23
      %s25 = sshll.u32 [#allocation6], 4
      %s26 = int_to_ptr.vmem [resolvable:$true] %s25
      %28 = dma.hbm_to_vmem [thread:$0]  %s24, 128, %s26, [#allocation7]
    $region5: #{tpu_custom_call.1} parent=1 // pred_fallthru
      _
    // Predicated region
    $region6: #{tpu_custom_call.1} parent=1 // pred_check
      _
    $region7: #{tpu_custom_call.1} parent=1 // pred_check_branch
      %30 = sbr.rel (0) target = $region9
    $region8: #{tpu_custom_call.1} parent=1 // pred_region
      %32 = dma.done [#allocation7], 128
    $region9: #{tpu_custom_call.1} parent=1 // pred_fallthru
      _
    %s33 = smul.u32 0, 8
    %s34 = sld [smem:[#allocation5 + %s33]]
    %s35 = scalar_lea.hbm %s2, %s34
    // Predicated region
    $region10: #{tpu_custom_call.1} parent=1 // pred_check
      _
    $region11: #{tpu_custom_call.1} parent=1 // pred_check_branch
      %37 = sbr.rel target = $region13
    $region12: #{tpu_custom_call.1} parent=1 // pred_region
      %38 = sst [smem:[#allocation12]] [#allocation11]
      %39 = sst [smem:[#allocation13]] [#allocation10]
    $region13: #{tpu_custom_call.1} parent=1 // pred_fallthru
      _
    %41 = shalt.err (0)
    %s43 = sshll.u32 %s35, 4
    %s44 = int_to_ptr.hbm [resolvable:$true] %s43
    %s45 = sshll.u32 [#allocation2], 4
    %s46 = int_to_ptr.vmem [resolvable:$true] %s45
    %48 = dma.hbm_to_vmem [thread:$0]  %s44, 16, %s46, [#allocation3]
    %s49 = sadd.s32 %s33, 1
    %s50 = sld [smem:[#allocation5 + %s49]]
    %s51 = scalar_lea.hbm %s2, %s50
    %s52 = scalar_lea.vmem [#allocation2], 1
    %s53 = scalar_lea.sflag [#allocation3], 1
    // Predicated region
    $region14: #{tpu_custom_call.1} parent=1 // pred_check
      _
    $region15: #{tpu_custom_call.1} parent=1 // pred_check_branch
      %55 = sbr.rel target = $region17
    $region16: #{tpu_custom_call.1} parent=1 // pred_region
      %56 = sst [smem:[#allocation12]] [#allocation15]
      %57 = sst [smem:[#allocation13]] [#allocation14]
    $region17: #{tpu_custom_call.1} parent=1 // pred_fallthru
      _
    %59 = shalt.err (0)
    %s61 = sshll.u32 %s51, 4
    %s62 = int_to_ptr.hbm [resolvable:$true] %s61
    %s63 = sshll.u32 %s52, 4
    %s64 = int_to_ptr.vmem [resolvable:$true] %s63
    %66 = dma.hbm_to_vmem [thread:$0]  %s62, 16, %s64, %s53
    %s67 = sadd.s32 %s33, 2
    %s68 = sld [smem:[#allocation5 + %s67]]
    %s69 = scalar_lea.hbm %s2, %s68
    %s70 = scalar_lea.vmem [#allocation2], 2
    %s71 = scalar_lea.sflag [#allocation3], 2
    // Predicated region
    $region18: #{tpu_custom_call.1} parent=1 // pred_check
      _
    $region19: #{tpu_custom_call.1} parent=1 // pred_check_branch
      %73 = sbr.rel target = $region21
    $region20: #{tpu_custom_call.1} parent=1 // pred_region
      %74 = sst [smem:[#allocation12]] [#allocation17]
      %75 = sst [smem:[#allocation13]] [#allocation16]
    $region21: #{tpu_custom_call.1} parent=1 // pred_fallthru
      _
    %77 = shalt.err (0)
    %s79 = sshll.u32 %s69, 4
    %s80 = int_to_ptr.hbm [resolvable:$true] %s79
    %s81 = sshll.u32 %s70, 4
    %s82 = int_to_ptr.vmem [resolvable:$true] %s81
    %84 = dma.hbm_to_vmem [thread:$0]  %s80, 16, %s82, %s71
    %s85 = sadd.s32 %s33, 3
    %s86 = sld [smem:[#allocation5 + %s85]]
    %s87 = scalar_lea.hbm %s2, %s86
    %s88 = scalar_lea.vmem [#allocation2], 3
    %s89 = scalar_lea.sflag [#allocation3], 3
    // Predicated region
    $region22: #{tpu_custom_call.1} parent=1 // pred_check
      _
    $region23: #{tpu_custom_call.1} parent=1 // pred_check_branch
      %91 = sbr.rel target = $region25
    $region24: #{tpu_custom_call.1} parent=1 // pred_region
      %92 = sst [smem:[#allocation12]] [#allocation19]
      %93 = sst [smem:[#allocation13]] [#allocation18]
    $region25: #{tpu_custom_call.1} parent=1 // pred_fallthru
      _
    %95 = shalt.err (0)
    %s97 = sshll.u32 %s87, 4
    %s98 = int_to_ptr.hbm [resolvable:$true] %s97
    %s99 = sshll.u32 %s88, 4
    %s100 = int_to_ptr.vmem [resolvable:$true] %s99
    %102 = dma.hbm_to_vmem [thread:$0]  %s98, 16, %s100, %s89
    %s103 = sadd.s32 %s33, 4
    %s104 = sld [smem:[#allocation5 + %s103]]
    %s105 = scalar_lea.hbm %s2, %s104
    %s106 = scalar_lea.vmem [#allocation2], 4
    %s107 = scalar_lea.sflag [#allocation3], 4
    // Predicated region
    $region26: #{tpu_custom_call.1} parent=1 // pred_check
      _
    $region27: #{tpu_custom_call.1} parent=1 // pred_check_branch
      %109 = sbr.rel target = $region29
    $region28: #{tpu_custom_call.1} parent=1 // pred_region
      %110 = sst [smem:[#allocation12]] [#allocation21]
      %111 = sst [smem:[#allocation13]] [#allocation20]
    $region29: #{tpu_custom_call.1} parent=1 // pred_fallthru
      _
    %113 = shalt.err (0)
    %s115 = sshll.u32 %s105, 4
    %s116 = int_to_ptr.hbm [resolvable:$true] %s115
    %s117 = sshll.u32 %s106, 4
    %s118 = int_to_ptr.vmem [resolvable:$true] %s117
    %120 = dma.hbm_to_vmem [thread:$0]  %s116, 16, %s118, %s107
    %s121 = sadd.s32 %s33, 5
    %s122 = sld [smem:[#allocation5 + %s121]]
    %s123 = scalar_lea.hbm %s2, %s122
    %s124 = scalar_lea.vmem [#allocation2], 5
    %s125 = scalar_lea.sflag [#allocation3], 5
    // Predicated region
    $region30: #{tpu_custom_call.1} parent=1 // pred_check
      _
    $region31: #{tpu_custom_call.1} parent=1 // pred_check_branch
      %127 = sbr.rel target = $region33
    $region32: #{tpu_custom_call.1} parent=1 // pred_region
      %128 = sst [smem:[#allocation12]] [#allocation23]
      %129 = sst [smem:[#allocation13]] [#allocation22]
    $region33: #{tpu_custom_call.1} parent=1 // pred_fallthru
      _
    %131 = shalt.err (0)
    %s133 = sshll.u32 %s123, 4
    %s134 = int_to_ptr.hbm [resolvable:$true] %s133
    %s135 = sshll.u32 %s124, 4
    %s136 = int_to_ptr.vmem [resolvable:$true] %s135
    %138 = dma.hbm_to_vmem [thread:$0]  %s134, 16, %s136, %s125
    %s139 = sadd.s32 %s33, 6
    %s140 = sld [smem:[#allocation5 + %s139]]
    %s141 = scalar_lea.hbm %s2, %s140
    %s142 = scalar_lea.vmem [#allocation2], 6
    %s143 = scalar_lea.sflag [#allocation3], 6
    // Predicated region
    $region34: #{tpu_custom_call.1} parent=1 // pred_check
      _
    $region35: #{tpu_custom_call.1} parent=1 // pred_check_branch
      %145 = sbr.rel target = $region37
    $region36: #{tpu_custom_call.1} parent=1 // pred_region
      %146 = sst [smem:[#allocation12]] [#allocation25]
      %147 = sst [smem:[#allocation13]] [#allocation24]
    $region37: #{tpu_custom_call.1} parent=1 // pred_fallthru
      _
    %149 = shalt.err (0)
    %s151 = sshll.u32 %s141, 4
    %s152 = int_to_ptr.hbm [resolvable:$true] %s151
    %s153 = sshll.u32 %s142, 4
    %s154 = int_to_ptr.vmem [resolvable:$true] %s153
    %156 = dma.hbm_to_vmem [thread:$0]  %s152, 16, %s154, %s143
    %s157 = sadd.s32 %s33, 7
    %s158 = sld [smem:[#allocation5 + %s157]]
    %s159 = scalar_lea.hbm %s2, %s158
    %s160 = scalar_lea.vmem [#allocation2], 7
    %s161 = scalar_lea.sflag [#allocation3], 7
    // Predicated region
    $region38: #{tpu_custom_call.1} parent=1 // pred_check
      _
    $region39: #{tpu_custom_call.1} parent=1 // pred_check_branch
      %163 = sbr.rel target = $region41
    $region40: #{tpu_custom_call.1} parent=1 // pred_region
      %164 = sst [smem:[#allocation12]] [#allocation27]
      %165 = sst [smem:[#allocation13]] [#allocation26]
    $region41: #{tpu_custom_call.1} parent=1 // pred_fallthru
      _
    %167 = shalt.err (0)
    %s169 = sshll.u32 %s159, 4
    %s170 = int_to_ptr.hbm [resolvable:$true] %s169
    %s171 = sshll.u32 %s160, 4
    %s172 = int_to_ptr.vmem [resolvable:$true] %s171
    %174 = dma.hbm_to_vmem [thread:$0]  %s170, 16, %s172, %s161
    %s175 = smul.u32 1, 1
    %s176 = sshll.u32 %s175, 4
    %177 = dma.done [#allocation3], %s176
    %s178 = sshll.u32 %s175, 4
    %179 = dma.done %s53, %s178
    %s180 = sshll.u32 %s175, 4
    %181 = dma.done %s71, %s180
    %s182 = sshll.u32 %s175, 4
    %183 = dma.done %s89, %s182
    %s184 = sshll.u32 %s175, 4
    %185 = dma.done %s107, %s184
    %s186 = sshll.u32 %s175, 4
    %187 = dma.done %s125, %s186
    %s188 = sshll.u32 %s175, 4
    %189 = dma.done %s143, %s188
    %s190 = sshll.u32 %s175, 4
    %191 = dma.done %s161, %s190
    %v192 = vld [vmem:[#allocation6] sm:$0xff]
    %v193 = vld [vmem:[#allocation2] sm:$0xff]
    %v194 = vmul.f32 %v193, %v193
    %195 = vadd.xlane.f32.xlu0 %v194
    %v196 = vpop.xlane.xlu0 %195
    %v197 = vmul.f32 %v192, %v192
    %198 = vadd.xlane.f32.xlu0 %v197
    %v199 = vpop.xlane.xlu0 %198
    %v200 = vrsqrt.pop %v196
    %v201 = vmul.f32 %v200, %v196
    %v202 = vmul.f32 %v201, %v200
    %v203 = vmul.f32 0.5, %v202
    %v204 = vsub.f32 1.5, %v203
    %v205 = vmul.f32 %v200, %v204
    %v206 = vmul.f32 %v196, %v205
    %vm207 = vcmp.eq.f32.partialorder %v196, inf
    %v208 = vsel %vm207, %v196, %v206
    %vm209 = vcmp.eq.f32.partialorder %v196, 0.0
    %v210 = vand.u32 %v196, 2147483648
    %v211 = vsel %vm209, %v210, %v208
    %v212 = vrsqrt.pop %v199
    %v213 = vmul.f32 %v212, %v199
    %v214 = vmul.f32 %v213, %v212
    %v215 = vmul.f32 0.5, %v214
    %v216 = vsub.f32 1.5, %v215
    %v217 = vmul.f32 %v212, %v216
    %vm218 = vweird.f32 %v199
    %vm219 = vweird.f32 %v212
    %vm220 = vmor %vm218, %vm219
    %v221 = vsel %vm220, %v212, %v217
    %v222 = vmul.f32 %v211, %v221
    %v223 = vmul.f32 %v192, %v222
    %224 = vst [vmem:[#allocation9] sm:$0xff] %v223
    // Predicated region
    $region42: #{tpu_custom_call.1} parent=1 // pred_check
      _
    $region43: #{tpu_custom_call.1} parent=1 // pred_check_branch
      %226 = sbr.rel (0) target = $region45
    $region44: #{tpu_custom_call.1} parent=1 // pred_region
      %228 = vsyncadd [#allocation8], 0
      %s230 = sshll.u32 [#allocation9], 4
      %s231 = int_to_ptr.vmem [resolvable:$true] %s230
      %s232 = sshll.u32 %s3, 4
      %s233 = int_to_ptr.hbm [resolvable:$true] %s232
      %235 = dma.vmem_to_hbm [thread:$0]  %s231, 128, %s233, [#allocation8]
    $region45: #{tpu_custom_call.1} parent=1 // pred_fallthru
      _
    // Predicated region
    $region46: #{tpu_custom_call.1} parent=1 // pred_check
      _
    $region47: #{tpu_custom_call.1} parent=1 // pred_check_branch
      %237 = sbr.rel (0) target = $region49
    $region48: #{tpu_custom_call.1} parent=1 // pred_region
      %239 = dma.done [#allocation8], 128
    $region49: #{tpu_custom_call.1} parent=1 // pred_fallthru
      _
    %240 = vsyncpa [#allocation7], 1
    %241 = vsyncpa [#allocation8], 1
  %242 = vsyncmov [#allocation3]
  %s243 = vpop.sfrf %242
  %p244 = scmp.eq.s32.totalorder %s243, 0
  %p245 = pneg %p244
  %247 = shalt.err (%p245)
  %s248 = scalar_lea.sflag [#allocation3], 1
  %249 = vsyncmov %s248
  %s250 = vpop.sfrf %249
  %p251 = scmp.eq.s32.totalorder %s250, 0
  %p252 = pneg %p251
  %254 = shalt.err (%p252)
  %s255 = scalar_lea.sflag [#allocation3], 2
  %256 = vsyncmov %s255
  %s257 = vpop.sfrf %256
  %p258 = scmp.eq.s32.totalorder %s257, 0
  %p259 = pneg %p258
  %261 = shalt.err (%p259)
  %s262 = scalar_lea.sflag [#allocation3], 3
  %263 = vsyncmov %s262
  %s264 = vpop.sfrf %263
  %p265 = scmp.eq.s32.totalorder %s264, 0
  %p266 = pneg %p265
  %268 = shalt.err (%p266)
  %s269 = scalar_lea.sflag [#allocation3], 4
  %270 = vsyncmov %s269
  %s271 = vpop.sfrf %270
  %p272 = scmp.eq.s32.totalorder %s271, 0
  %p273 = pneg %p272
  %275 = shalt.err (%p273)
  %s276 = scalar_lea.sflag [#allocation3], 5
  %277 = vsyncmov %s276
  %s278 = vpop.sfrf %277
  %p279 = scmp.eq.s32.totalorder %s278, 0
  %p280 = pneg %p279
  %282 = shalt.err (%p280)
  %s283 = scalar_lea.sflag [#allocation3], 6
  %284 = vsyncmov %s283
  %s285 = vpop.sfrf %284
  %p286 = scmp.eq.s32.totalorder %s285, 0
  %p287 = pneg %p286
  %289 = shalt.err (%p287)
  %s290 = scalar_lea.sflag [#allocation3], 7
  %291 = vsyncmov %s290
  %s292 = vpop.sfrf %291
  %p293 = scmp.eq.s32.totalorder %s292, 0
  %p294 = pneg %p293
  %296 = shalt.err (%p294)

</llo_original>
